<compile_context>
chip_gen: v7x
topology: tpu7x:2x2x1
jax: 0.10.0
libtpu: 0.0.40
codegen_flags: <defaults>
</compile_context>

<pallas_src>
import functools

import jax
import jax.numpy as jnp
from jax import lax
from jax.experimental import pallas as pl
from jax.experimental.pallas import tpu as pltpu


_VMEM_LIMIT = 32 * 1024 * 1024   # safe on v5e/v6e (128 MiB) and v7x (64 MiB/TC)


# ---------------------------------------------------------------------------
# Kernels
# ---------------------------------------------------------------------------
def _mha_head_kernel(x_ref, w_ref, o_ref, *, dim_head):
    """Fused qkv projection + attention for one (batch, head) grid step.

    x_ref: (1, n, dim) bf16          -- resident across the inner `heads` axis
    w_ref: (1, dim, 3*dim_head) bf16 -- head-major columns [q_h | k_h | v_h],
                                        softmax scale pre-folded into q_h
    o_ref: (1, 1, n, dim_head) bf16  -- lane-dense per-head output tile
    """
    x = x_ref[0]                                     # (n, dim) bf16
    w = w_ref[0]                                     # (dim, 3*dh) bf16
    qkv = jnp.dot(x, w,
                  preferred_element_type=jnp.float32).astype(jnp.bfloat16)

    q = qkv[:, :dim_head]
    k = qkv[:, dim_head:2 * dim_head]
    v = qkv[:, 2 * dim_head:]

    # QK^T contracting last dims of both (no materialized k.T); scale folded.
    s = lax.dot_general(q, k, dimension_numbers=(((1,), (1,)), ((), ())),
                        preferred_element_type=jnp.float32)        # (n, n) f32
    # TODO(synk): flash/online-softmax KV tiling for long sequences (n >~ 1k)
    # to bound the (n, n) score tile within v7x's 64 MiB VMEM.
    m = jnp.max(s, axis=-1, keepdims=True)
    p = jnp.exp(s - m)                                              # (n, n) f32
    denom = jnp.sum(p, axis=-1, keepdims=True)                      # (n, 1) f32

    # Deferred normalization: normalize the (n, dim_head) result instead of
    # the (n, n) probability matrix.
    o = jnp.dot(p.astype(jnp.bfloat16), v,
                preferred_element_type=jnp.float32)                 # (n, dh) f32
    o = o * pl.reciprocal(denom, approx=True)
    o_ref[0, 0] = o.astype(o_ref.dtype)


def _out_proj_kernel(y_ref, w_ref, b_ref, o_ref, acc_ref):
    """Output projection: per-head contributions accumulated over grid axis 2."""
    @pl.when(pl.program_id(2) == 0)
    def _init():
        acc_ref[...] = jnp.zeros_like(acc_ref)

    acc_ref[...] += jnp.dot(y_ref[0], w_ref[0],
                            preferred_element_type=jnp.float32)

    @pl.when(pl.program_id(2) == pl.num_programs(2) - 1)
    def _store():
        o_ref[...] = (acc_ref[...] + b_ref[...]).astype(o_ref.dtype)


# ---------------------------------------------------------------------------
# One-time parameter preparation (hoisted out of the per-call hot path)
# ---------------------------------------------------------------------------
def prepare_params(w_qkv, w_out, b_out, *, heads, dim_head):
    """Fold scale into q, reorder to head-major layout, cast to bf16."""
    dim = w_qkv.shape[0]
    scale = dim_head ** (-0.5)

    w3 = w_qkv.reshape(dim, 3, heads, dim_head)
    w3 = w3.at[:, 0].multiply(scale)                 # fold softmax scale into q
    # (heads, dim, 3*dim_head); per-head columns ordered [q_h | k_h | v_h].
    w_qkv_hm = jnp.transpose(w3, (2, 0, 1, 3)).reshape(
        heads, dim, 3 * dim_head).astype(jnp.bfloat16)

    w_out_hm = w_out.reshape(heads, dim_head, dim).astype(jnp.bfloat16)
    b_out2d = b_out.reshape(1, dim).astype(jnp.float32)
    return {"w_qkv_hm": w_qkv_hm, "w_out_hm": w_out_hm, "b_out": b_out2d}


# ---------------------------------------------------------------------------
# Wrappers
# ---------------------------------------------------------------------------
def _pick_tile(size, candidates=(1024, 512, 256, 128)):
    """Full extent if small, else largest dividing candidate, else None (pad)."""
    if size <= candidates[0]:
        return size
    for t in candidates:
        if size % t == 0:
            return t
    return None


def _pallas_fused_attention(x_bf, w_qkv_hm, *, heads, dim_head):
    """qkv projection + per-head attention; output (heads, b, n, dim_head)."""
    b, n, dim = x_bf.shape
    kern = functools.partial(_mha_head_kernel, dim_head=dim_head)
    # TODO(synk): batch-block the x tile (multiple batch rows per step) when n
    # is tiny to raise MXU M-occupancy; requires n to be a multiple of 8.
    return pl.pallas_call(
        kern,
        out_shape=jax.ShapeDtypeStruct((heads, b, n, dim_head), jnp.bfloat16),
        grid=(b, heads),
        in_specs=[pl.BlockSpec((1, n, dim), lambda bi, h: (bi, 0, 0)),
                  pl.BlockSpec((1, dim, 3 * dim_head), lambda bi, h: (h, 0, 0))],
        out_specs=pl.BlockSpec((1, 1, n, dim_head),
                               lambda bi, h: (h, bi, 0, 0)),
        compiler_params=pltpu.CompilerParams(
            dimension_semantics=("parallel", "parallel"),
            vmem_limit_bytes=_VMEM_LIMIT),
    )(x_bf, w_qkv_hm)


def _pallas_out_proj(y_hm, w_out_hm, b_out2d, *, out_dtype):
    """(heads, M, dh) x (heads, dh, dim) summed over heads, + bias -> (M, dim)."""
    heads, M, dh = y_hm.shape
    dim = w_out_hm.shape[-1]

    tm = _pick_tile(M)
    Mp = M
    if tm is None:                                   # large, non-divisible M
        tm = 512
        Mp = ((M + tm - 1) // tm) * tm
        y_hm = jnp.pad(y_hm, ((0, 0), (0, Mp - M), (0, 0)))
    tn = _pick_tile(dim)
    if tn is None:
        tn = dim                                     # lane-dense full-extent N

    out = pl.pallas_call(
        _out_proj_kernel,
        out_shape=jax.ShapeDtypeStruct((Mp, dim), out_dtype),
        grid=(Mp // tm, dim // tn, heads),
        in_specs=[pl.BlockSpec((1, tm, dh), lambda i, j, h: (h, i, 0)),
                  pl.BlockSpec((1, dh, tn), lambda i, j, h: (h, 0, j)),
                  pl.BlockSpec((1, tn), lambda i, j, h: (0, j))],
        out_specs=pl.BlockSpec((tm, tn), lambda i, j, h: (i, j)),
        scratch_shapes=[pltpu.VMEM((tm, tn), jnp.float32)],
        compiler_params=pltpu.CompilerParams(
            dimension_semantics=("parallel", "parallel", "arbitrary"),
            vmem_limit_bytes=_VMEM_LIMIT),
    )(y_hm, w_out_hm, b_out2d)
    return out[:M] if Mp != M else out


def multi_head_attention(x, params, *, heads, dim_head):
    """Forward pass equivalent to MultiHeadAttention.forward (dropout=0)."""
    b, n, dim = x.shape
    x_bf = x.astype(jnp.bfloat16)

    # 1+2) fused qkv projection + attention, head-major lane-dense output.
    attn = _pallas_fused_attention(x_bf, params["w_qkv_hm"],
                                   heads=heads, dim_head=dim_head)
    # (heads, b, n, dh) -> (heads, b*n, dh): contiguous, free reshape.
    attn2d = attn.reshape(heads, b * n, dim_head)

    # 3) output projection with bias; heads form the reduction grid axis.
    y = _pallas_out_proj(attn2d, params["w_out_hm"], params["b_out"],
                         out_dtype=x.dtype)                      # (b*n, dim)
    return y.reshape(b, n, dim)


# ---------------------------------------------------------------------------
# Pure-JAX (f32) reference for verification
# ---------------------------------------------------------------------------
def reference_mha(x, w_qkv, w_out, b_out, *, heads, dim_head):
    b, n, dim = x.shape
    scale = dim_head ** (-0.5)
    qkv = jnp.einsum('bnc,co->bno', x, w_qkv)
    q, k, v = jnp.split(qkv, 3, axis=-1)

    def to_heads(t):
        return t.reshape(b, n, heads, dim_head).transpose(0, 2, 1, 3)

    q, k, v = map(to_heads, (q, k, v))
    dots = jnp.einsum('bhid,bhjd->bhij', q, k) * scale
    attn = jax.nn.softmax(dots, axis=-1)
    out = jnp.einsum('bhij,bhjd->bhid', attn, v)
    out = out.transpose(0, 2, 1, 3).reshape(b, n, heads * dim_head)
    return jnp.einsum('bno,oc->bnc', out, w_out) + b_out


# ---------------------------------------------------------------------------
if __name__ == "__main__":
    batch, seq, dim = 2, 8, 32
    heads, dim_head = 4, 16
    inner = heads * dim_head

    key = jax.random.PRNGKey(0)
    kx, kqkv, kout, kb = jax.random.split(key, 4)

    x = jax.random.normal(kx, (batch, seq, dim), dtype=jnp.float32)
    # Synthetic weights stored as (in, out).
    w_qkv = 0.05 * jax.random.normal(kqkv, (dim, 3 * inner), dtype=jnp.float32)
    w_out = 0.05 * jax.random.normal(kout, (inner, dim), dtype=jnp.float32)
    b_out = 0.05 * jax.random.normal(kb, (dim,), dtype=jnp.float32)

    # One-time parameter prep (scale fold, head-major reorder, bf16 cast).
    params = prepare_params(w_qkv, w_out, b_out, heads=heads, dim_head=dim_head)

    y = multi_head_attention(x, params, heads=heads, dim_head=dim_head)
    y = jax.block_until_ready(y)

    y_ref = reference_mha(x, w_qkv, w_out, b_out,
                          heads=heads, dim_head=dim_head)
    assert y.shape == (batch, seq, dim)
    # bf16 MXU inputs + approx reciprocal -> looser tolerance vs f32 reference.
    assert jnp.allclose(y, y_ref, rtol=2e-2, atol=2e-2), "mismatch vs reference"

    print("KERNEL_OK")
</pallas_src>

<mosaic_0001>
module attributes {stable_mosaic.version = 11 : i64} {
  func.func @_mha_head_kernel(%arg0: i32, %arg1: i32, %arg2: memref<1x8x32xbf16, #tpu.memory_space<vmem>>, %arg3: memref<1x32x48xbf16, #tpu.memory_space<vmem>>, %arg4: memref<1x1x8x16xbf16, #tpu.memory_space<vmem>>) attributes {dimension_semantics = [#tpu.dimension_semantics<parallel>, #tpu.dimension_semantics<parallel>], iteration_bounds = array<i64: 2, 4>, scalar_prefetch = 0 : i64, scratch_operands = 0 : i64, tpu.core_type = #tpu.core_type<tc>, window_params = [{transform_indices = @transform_0, window_bounds = array<i64: 1, 8, 32>}, {transform_indices = @transform_1, window_bounds = array<i64: 1, 32, 48>}, {transform_indices = @transform_2, window_bounds = array<i64: 1, 1, 8, 16>}]} {
    %c0 = arith.constant 0 : index
    %c0_0 = arith.constant 0 : index
    %c0_1 = arith.constant 0 : index
    %0 = vector.load %arg2[%c0, %c0_0, %c0_1] : memref<1x8x32xbf16, #tpu.memory_space<vmem>>, vector<1x8x32xbf16>
    %1 = vector.shape_cast %0 : vector<1x8x32xbf16> to vector<8x32xbf16>
    %c0_2 = arith.constant 0 : index
    %c0_3 = arith.constant 0 : index
    %c0_4 = arith.constant 0 : index
    %2 = vector.load %arg3[%c0_2, %c0_3, %c0_4] : memref<1x32x48xbf16, #tpu.memory_space<vmem>>, vector<1x32x48xbf16>
    %3 = vector.shape_cast %2 : vector<1x32x48xbf16> to vector<32x48xbf16>
    %cst = arith.constant dense<0.000000e+00> : vector<8x48xf32>
    %4 = tpu.matmul %1, %3, %cst {dimension_numbers = #tpu.dot_dimension_numbers<[1], [0], [0], [1], [0, 0, 1, 1], [], []>} : vector<8x32xbf16>, vector<32x48xbf16>, vector<8x48xf32> -> vector<8x48xf32>
    %5 = arith.truncf %4 : vector<8x48xf32> to vector<8x48xbf16>
    %6 = vector.extract_strided_slice %5 {offsets = [0, 0], sizes = [8, 16], strides = [1, 1]} : vector<8x48xbf16> to vector<8x16xbf16>
    %7 = vector.extract_strided_slice %5 {offsets = [0, 16], sizes = [8, 16], strides = [1, 1]} : vector<8x48xbf16> to vector<8x16xbf16>
    %8 = vector.extract_strided_slice %5 {offsets = [0, 32], sizes = [8, 16], strides = [1, 1]} : vector<8x48xbf16> to vector<8x16xbf16>
    %cst_5 = arith.constant dense<0.000000e+00> : vector<8x8xf32>
    %9 = tpu.matmul %6, %7, %cst_5 {dimension_numbers = #tpu.dot_dimension_numbers<[1], [1], [0], [0], [0, 0, 1, 0], [], []>} : vector<8x16xbf16>, vector<8x16xbf16>, vector<8x8xf32> -> vector<8x8xf32>
    %cst_6 = arith.constant dense<0xFF800000> : vector<8xf32>
    %10 = vector.multi_reduction <maximumf>, %9, %cst_6 [1] : vector<8x8xf32> to vector<8xf32>
    %11 = vector.shape_cast %10 : vector<8xf32> to vector<8x1xf32>
    %12 = vector.broadcast %11 : vector<8x1xf32> to vector<8x8xf32>
    %13 = arith.subf %9, %12 : vector<8x8xf32>
    %14 = math.exp %13 : vector<8x8xf32>
    %cst_7 = arith.constant dense<0.000000e+00> : vector<8xf32>
    %15 = vector.multi_reduction <add>, %14, %cst_7 [1] : vector<8x8xf32> to vector<8xf32>
    %16 = vector.shape_cast %15 : vector<8xf32> to vector<8x1xf32>
    %17 = arith.truncf %14 : vector<8x8xf32> to vector<8x8xbf16>
    %cst_8 = arith.constant dense<0.000000e+00> : vector<8x16xf32>
    %18 = tpu.matmul %17, %8, %cst_8 {dimension_numbers = #tpu.dot_dimension_numbers<[1], [0], [0], [1], [0, 0, 1, 1], [], []>} : vector<8x8xbf16>, vector<8x16xbf16>, vector<8x16xf32> -> vector<8x16xf32>
    %19 = tpu.reciprocal %16 {approx = true} : vector<8x1xf32> -> vector<8x1xf32>
    %20 = vector.broadcast %19 : vector<8x1xf32> to vector<8x16xf32>
    %21 = arith.mulf %18, %20 : vector<8x16xf32>
    %22 = arith.truncf %21 : vector<8x16xf32> to vector<8x16xbf16>
    %c0_9 = arith.constant 0 : index
    %c0_10 = arith.constant 0 : index
    %c0_11 = arith.constant 0 : index
    %c0_12 = arith.constant 0 : index
    %23 = vector.load %arg4[%c0_9, %c0_10, %c0_11, %c0_12] : memref<1x1x8x16xbf16, #tpu.memory_space<vmem>>, vector<1x1x8x16xbf16>
    %24 = vector.shape_cast %23 : vector<1x1x8x16xbf16> to vector<8x16xbf16>
    %25 = vector.shape_cast %22 : vector<8x16xbf16> to vector<1x1x8x16xbf16>
    tpu.vector_store %arg4[%c0_9, %c0_10, %c0_11, %c0_12], %25 {strides = array<i32>} : memref<1x1x8x16xbf16, #tpu.memory_space<vmem>>, vector<1x1x8x16xbf16>,
    return
  }
  func.func @transform_0(%arg0: i32, %arg1: i32) -> (i32, i32, i32) {
    %c0_i32 = arith.constant 0 : i32
    %c0_i32_0 = arith.constant 0 : i32
    %c0_i32_1 = arith.constant 0 : i32
    return %arg0, %c0_i32, %c0_i32_0 : i32, i32, i32
  }
  func.func @transform_1(%arg0: i32, %arg1: i32) -> (i32, i32, i32) {
    %c0_i32 = arith.constant 0 : i32
    %c0_i32_0 = arith.constant 0 : i32
    %c0_i32_1 = arith.constant 0 : i32
    return %arg1, %c0_i32, %c0_i32_0 : i32, i32, i32
  }
  func.func @transform_2(%arg0: i32, %arg1: i32) -> (i32, i32, i32, i32) {
    %c0_i32 = arith.constant 0 : i32
    %c0_i32_0 = arith.constant 0 : i32
    %c0_i32_1 = arith.constant 0 : i32
    return %arg1, %arg0, %c0_i32, %c0_i32_0 : i32, i32, i32, i32
  }
}

</mosaic_0001>

<llo_original>
// kernel: tpu_custom_call.1
$region0: #{tpu_custom_call.1}
  #allocation0 [shape = 'u32[]', space=smem, size = 0x4, offset = 0x4, fixed_abs, tag = 'smem constant byte address 0x4 - core index']
  #allocation1 [shape = 'u32[144,128]{1,0:T(1,128)}', space=vmem, size = 0x12000, scoped, tag = 'internal scratch']
  %s0 = inlined_call_operand.hbm [shape: bf16[2,8,32], index: 0, kind: input, shape index: {}]
  %s1 = inlined_call_operand.hbm [shape: bf16[4,32,48], index: 1, kind: input, shape index: {}]
  %s2 = inlined_call_operand.hbm [shape: bf16[4,2,8,16], index: 2, kind: output, shape index: {}]
  %s3 = sld [smem:[#allocation0]]
  $region49: #{tpu_custom_call.1} parent=0
    _
  %s5 = ssub.s32 1, %s3
  %s6 = scalar_select 0, %s5, %s3
  $region1: #{tpu_custom_call.1} parent=0
    #allocation2 [shape = 'u8[4096]{0}', space=vmem, size = 0x1000, scoped, tag = 'input window, operand 0']
    #allocation3 [shape = 's32[2]{0}', space=sflag, size = 0x8, scoped, tag = 'scoped memory for tpu_custom_call.1']
    #allocation4 [shape = 's32[2]{0}', space=sflag, size = 0x8, scoped, tag = 'scoped memory for tpu_custom_call.1']
    #allocation5 [shape = 'u8[16384]{0}', space=vmem, size = 0x4000, scoped, tag = 'input window, operand 1']
    #allocation6 [shape = 's32[2]{0}', space=sflag, size = 0x8, scoped, tag = 'scoped memory for tpu_custom_call.1']
    #allocation7 [shape = 'u8[4096]{0}', space=vmem, size = 0x1000, scoped, tag = 'output window, operand 0']
    %7 = vsyncpa [#allocation3], 0
    %s8 = scalar_lea.sflag [#allocation3], 1
    %9 = vsyncpa %s8, 0
    %10 = vsyncpa [#allocation6], 0
    %s11 = scalar_lea.sflag [#allocation6], 1
    %12 = vsyncpa %s11, 0
    %13 = vsyncpa [#allocation4], 0
    %s14 = scalar_lea.sflag [#allocation4], 1
    %15 = vsyncpa %s14, 0
    loop: start=0, step=1, limit=10
    $region2: #{tpu_custom_call.1} parent=1 // loop_pre_header
      _
    $region3: #{tpu_custom_call.1} parent=1 // loop_header
      %s17 = sphi 0, %s21
      %p18 = scmp.ge.s32.totalorder %s17, 10
      %s24 = sphi 0, %s36
      %s25 = sphi 0, %s32
      %s26 = sphi 0, %s24
      %s27 = sphi 0, %s25
      %s28 = sphi 0, %s26
      %s29 = sphi 0, %s27
      %s39 = sphi 0, %s41
      %s42 = sphi 0, %s39
      %s43 = sphi 0, %s42
      %s59 = sphi 0, %s43
      %s65 = sphi 0, %s67
      %s68 = sphi 0, %s65
      %s69 = sphi 0, %s68
      %s85 = sphi 0, %s69
      %s93 = sphi 0, %s95
      %s96 = sphi 0, %s93
      %s97 = sphi 0, %s96
      %s113 = sphi 0, %s97
    $region4: #{tpu_custom_call.1} parent=1 // loop_header_branch
      %20 = sbr.rel (%p18) target = $region8
    $region5: #{tpu_custom_call.1} parent=1 // loop_body
      %s22 = ssub.s32 %s17, 1
      %s23 = ssub.s32 %s17, 2
      %s30 = sadd.s32 1, %s25
      %p31 = scmp.ge.s32.totalorder %s30, 4
      %s32 = scalar_select %p31, 0, %s30
      %s33 = sadd.s32 1, %s24
      %s34 = scalar_select %p31, %s33, %s24
      %p35 = scmp.ge.s32.totalorder %s34, 2
      %s36 = scalar_select %p35, 0, %s34
      %s37 = ssub.s32 %s24, %s36
      %p38 = scmp.eq.s32.totalorder %s37, 0
      %s40 = sadd.s32 %s39, 1
      %s41 = scalar_select %p38, %s39, %s40
      %p44 = pneg %p38
      %p45 = scmp.eq.s32.totalorder %s17, 7
      %p46 = por %p44, %p45
      %p47 = scmp.ne.s32.totalorder %s39, %s42
      %p48 = scmp.eq.s32.totalorder %s17, 0
      %p49 = por %p47, %p48
      %p50 = scmp.ne.s32.totalorder %s39, %s42
      %p51 = scmp.eq.s32.totalorder %s22, 7
      %p52 = por %p50, %p51
      %p53 = scmp.ne.s32.totalorder %s42, %s43
      %p54 = scmp.eq.s32.totalorder %s22, 0
      %p55 = por %p53, %p54
      %p56 = scmp.ne.s32.totalorder %s42, %s43
      %p57 = scmp.eq.s32.totalorder %s23, 7
      %p58 = por %p56, %p57
      %p60 = scmp.ne.s32.totalorder %s43, %s59
      %p61 = scmp.eq.s32.totalorder %s23, 0
      %p62 = por %p60, %p61
      %s63 = ssub.s32 %s25, %s32
      %p64 = scmp.eq.s32.totalorder %s63, 0
      %s66 = sadd.s32 %s65, 1
      %s67 = scalar_select %p64, %s65, %s66
      %p70 = pneg %p64
      %p71 = scmp.eq.s32.totalorder %s17, 7
      %p72 = por %p70, %p71
      %p73 = scmp.ne.s32.totalorder %s65, %s68
      %p74 = scmp.eq.s32.totalorder %s17, 0
      %p75 = por %p73, %p74
      %p76 = scmp.ne.s32.totalorder %s65, %s68
      %p77 = scmp.eq.s32.totalorder %s22, 7
      %p78 = por %p76, %p77
      %p79 = scmp.ne.s32.totalorder %s68, %s69
      %p80 = scmp.eq.s32.totalorder %s22, 0
      %p81 = por %p79, %p80
      %p82 = scmp.ne.s32.totalorder %s68, %s69
      %p83 = scmp.eq.s32.totalorder %s23, 7
      %p84 = por %p82, %p83
      %p86 = scmp.ne.s32.totalorder %s69, %s85
      %p87 = scmp.eq.s32.totalorder %s23, 0
      %p88 = por %p86, %p87
      %s89 = ssub.s32 %s25, %s32
      %s90 = ssub.s32 %s24, %s36
      %s91 = sor.u32 %s89, %s90
      %p92 = scmp.eq.s32.totalorder %s91, 0
      %s94 = sadd.s32 %s93, 1
      %s95 = scalar_select %p92, %s93, %s94
      %p98 = pneg %p92
      %p99 = scmp.eq.s32.totalorder %s17, 7
      %p100 = por %p98, %p99
      %p101 = scmp.ne.s32.totalorder %s93, %s96
      %p102 = scmp.eq.s32.totalorder %s17, 0
      %p103 = por %p101, %p102
      %p104 = scmp.ne.s32.totalorder %s93, %s96
      %p105 = scmp.eq.s32.totalorder %s22, 7
      %p106 = por %p104, %p105
      %p107 = scmp.ne.s32.totalorder %s96, %s97
      %p108 = scmp.eq.s32.totalorder %s22, 0
      %p109 = por %p107, %p108
      %p110 = scmp.ne.s32.totalorder %s96, %s97
      %p111 = scmp.eq.s32.totalorder %s23, 7
      %p112 = por %p110, %p111
      %p114 = scmp.ne.s32.totalorder %s97, %s113
      %p115 = scmp.eq.s32.totalorder %s23, 0
      %p116 = por %p114, %p115
      %p117 = scmp.le.s32.totalorder 1, %s17
      %p118 = scmp.lt.s32.totalorder %s17, 9
      %p119 = pnand %p117, %p118
      %p120 = pneg %p119
      // Predicated region
      $region9: #{tpu_custom_call.1} parent=5 // pred_check
        _
      $region10: #{tpu_custom_call.1} parent=5 // pred_check_branch
        %122 = sbr.rel (%p119) target = $region12
      $region11: #{tpu_custom_call.1} parent=5 // pred_region
        %s123 = ssub.s32 %s17, 1
      $region12: #{tpu_custom_call.1} parent=5 // pred_fallthru
        _
      %p124 = scmp.lt.s32.totalorder %s17, 8
      // Predicated region
      $region13: #{tpu_custom_call.1} parent=5 // pred_check
        %p125 = pneg %p124
      $region14: #{tpu_custom_call.1} parent=5 // pred_check_branch
        %127 = sbr.rel (%p125) target = $region16
      $region15: #{tpu_custom_call.1} parent=5 // pred_region
        // Predicated region
        $region17: #{tpu_custom_call.1} parent=15 // pred_check
          %p128 = pneg %p49
        $region18: #{tpu_custom_call.1} parent=15 // pred_check_branch
          %130 = sbr.rel (%p128) target = $region20
        $region19: #{tpu_custom_call.1} parent=15 // pred_region
          %s131 = sand.u32 %s39, 1
          %s132 = scalar_lea.sflag [#allocation3], %s131
          %s133 = sand.u32 %s39, 1
          %s134 = smul.addr %s133, 4
          %s135 = scalar_lea.vmem [#allocation2], %s134
          %s137 = ssub.s32 64, 64
          %138 = vsyncadd %s132, %s137
          %s139 = smul.addr %s24, 64
          %s140 = scalar_lea.hbm %s0, %s139
          %s142 = sshll.u32 %s135, 4
          %s143 = int_to_ptr.vmem [resolvable:$true] %s142
          %145 = dma.hbm_to_vmem [thread:$0]  %s140, 64, %s143, %s132
        $region20: #{tpu_custom_call.1} parent=15 // pred_fallthru
          _
        // Predicated region
        $region21: #{tpu_custom_call.1} parent=15 // pred_check
          %p146 = pneg %p75
        $region22: #{tpu_custom_call.1} parent=15 // pred_check_branch
          %148 = sbr.rel (%p146) target = $region24
        $region23: #{tpu_custom_call.1} parent=15 // pred_region
          %s149 = sand.u32 %s65, 1
          %s150 = scalar_lea.sflag [#allocation6], %s149
          %s151 = sand.u32 %s65, 1
          %s152 = smul.addr %s151, 16
          %s153 = scalar_lea.vmem [#allocation5], %s152
          %s155 = ssub.s32 256, 256
          %156 = vsyncadd %s150, %s155
          %s157 = smul.addr %s25, 4
          %s158 = smul.addr %s157, 64
          %s159 = scalar_lea.hbm %s1, %s158
          %s160 = sshll.u32 %s153, 4
          %s161 = int_to_ptr.vmem [resolvable:$true] %s160
          %166 = dma.hbm_to_vmem [thread:$0]  %s159, 256, %s161, %s150, 64, 64, 4
        $region24: #{tpu_custom_call.1} parent=15 // pred_fallthru
          _
      $region16: #{tpu_custom_call.1} parent=5 // pred_fallthru
        _
      %p167 = scmp.le.s32.totalorder 1, %s17
      %p168 = scmp.lt.s32.totalorder %s17, 9
      %p169 = pnand %p167, %p168
      %p170 = pneg %p169
      // Predicated region
      $region25: #{tpu_custom_call.1} parent=5 // pred_check
        _
      $region26: #{tpu_custom_call.1} parent=5 // pred_check_branch
        %172 = sbr.rel (%p169) target = $region28
      $region27: #{tpu_custom_call.1} parent=5 // pred_region
        %s173 = ssub.s32 %s17, 1
        %s174 = sand.u32 %s42, 1
        %s175 = scalar_lea.sflag [#allocation3], %s174
        %s176 = sand.u32 %s42, 1
        %s177 = smul.addr %s176, 4
        %s178 = scalar_lea.vmem [#allocation2], %s177
        // Predicated region
        $region29: #{tpu_custom_call.1} parent=27 // pred_check
          %p179 = pneg %p55
        $region30: #{tpu_custom_call.1} parent=27 // pred_check_branch
          %181 = sbr.rel (%p179) target = $region32
        $region31: #{tpu_custom_call.1} parent=27 // pred_region
          %182 = dma.done %s175, 64
        $region32: #{tpu_custom_call.1} parent=27 // pred_fallthru
          _
        %s183 = sand.u32 %s68, 1
        %s184 = scalar_lea.sflag [#allocation6], %s183
        %s185 = sand.u32 %s68, 1
        %s186 = smul.addr %s185, 16
        %s187 = scalar_lea.vmem [#allocation5], %s186
        // Predicated region
        $region33: #{tpu_custom_call.1} parent=27 // pred_check
          %p188 = pneg %p81
        $region34: #{tpu_custom_call.1} parent=27 // pred_check_branch
          %190 = sbr.rel (%p188) target = $region36
        $region35: #{tpu_custom_call.1} parent=27 // pred_region
          %191 = dma.done %s184, 256
        $region36: #{tpu_custom_call.1} parent=27 // pred_fallthru
          _
        %s192 = sand.u32 %s42, 1
        %s193 = scalar_lea.sflag [#allocation3], %s192
        %s194 = sand.u32 %s42, 1
        %s195 = smul.addr %s194, 4
        %s196 = scalar_lea.vmem [#allocation2], %s195
        %p197 = pneg %p55
        %p198 = pneg %p52
        %s199 = sand.u32 %s68, 1
        %s200 = scalar_lea.sflag [#allocation6], %s199
        %s201 = sand.u32 %s68, 1
        %s202 = smul.addr %s201, 16
        %s203 = scalar_lea.vmem [#allocation5], %s202
        %p204 = pneg %p81
        %p205 = pneg %p78
        %p206 = pneg %p109
        %p207 = pneg %p106
        %s208 = sand.u32 %s96, 1
        %s209 = scalar_lea.sflag [#allocation4], %s208
        %s210 = sand.u32 %s96, 1
        %s211 = smul.addr %s210, 4
        %s212 = scalar_lea.vmem [#allocation7], %s211
        %v214 = vld [vmem:[%s178] sm:$0xf]
        %v215 = vld [vmem:[%s187] sm:$0xf]
        %v216 = vld [vmem:[%s187 + $0x4] sm:$0xf]
        %v217 = vld [vmem:[%s187 + $0x8] sm:$0xf]
        %v218 = vld [vmem:[%s187 + $0xc] sm:$0xf]
        %v223 = vunpack.c.l.b16 %v215
        %v224 = vunpack.c.l.b16 %v216
        %v225 = vunpack.c.l.b16 %v217
        %v226 = vunpack.c.l.b16 %v218
        %v227 = vpack.c.b16 %v224, %v223
        %v228 = vpack.c.b16 %v226, %v225
        %vm231 = vcmask 261120
        %v233 = vsel %vm231, %v214, 0
        %235 = vmatprep.subr.bf16.mxu0 0
        %236 = vmatpush1.bf16.msra.mxu0 %v227
        %237 = vmatprep.subr.bf16.mxu0 0
        %238 = vmatpush1.bf16.msra.mxu0 %v228
        %239 = vmatprep.subr.bf16.mxu0 0
        %240 = vmatpush1.bf16.msra.mxu0 0
        %241 = vmatprep.subr.bf16.mxu0 0
        %242 = vmatpush1.bf16.msra.mxu0 0
        %243 = vmatprep.subr.bf16.mxu0 0
        %244 = vmatpush1.bf16.msra.mxu0 0
        %245 = vmatprep.subr.bf16.mxu0 0
        %246 = vmatpush1.bf16.msra.mxu0 0
        %247 = vmatprep.subr.bf16.mxu0 0
        %248 = vmatpush1.bf16.msra.mxu0 0
        %249 = vmatprep.subr.bf16.mxu0 0
        %250 = vmatpush1.bf16.msra.mxu0 0
        %251 = vmatprep.subr.bf16.mxu0 0
        %252 = vmatpush1.bf16.msra.mxu0 0
        %253 = vmatprep.subr.bf16.mxu0 0
        %254 = vmatpush1.bf16.msra.mxu0 0
        %255 = vmatprep.subr.bf16.mxu0 0
        %256 = vmatpush1.bf16.msra.mxu0 0
        %257 = vmatprep.subr.bf16.mxu0 0
        %258 = vmatpush1.bf16.msra.mxu0 0
        %259 = vmatprep.subr.bf16.mxu0 0
        %260 = vmatpush1.bf16.msra.mxu0 0
        %261 = vmatprep.subr.bf16.mxu0 0
        %262 = vmatpush1.bf16.msra.mxu0 0
        %263 = vmatprep.subr.bf16.mxu0 0
        %264 = vmatpush1.bf16.msra.mxu0 0
        %265 = vmatprep.subr.bf16.mxu0 0
        %266 = vmatpush1.bf16.msra.mxu0 0
        %267 = vmatprep.mubr.bf16.mxu0 0
        %268 = vmatmul.mubr.bf16.gmra.mrb[0].mxu0 %v233
        %v269 = vpop.f32.mrb[0].mxu0
        %v270 = vadd.f32 0.0, %v269
        %v271 = vpop.f32.mrb[0].mxu0
        %v272 = vpop.f32.mrb[0].mxu0
        %v273 = vpop.f32.mrb[0].mxu0
        %274 = vdwg.mxu0
        %v275 = vpack.c.bf16 %v270, %v270
        %277 = vrot.lane.b32.xlu0 %v275, 112
        %v278 = vpop.permute.xlu0 %277
        %vm279 = vcmask 130048
        %v281 = vsel %vm279, %v275, 0
        %v284 = vsel %vm279, %v278, 0
        %286 = vmatprep.subr.bf16.mxu0 0
        %287 = vmatpush1.bf16.xpose.msra.mxu0 %v284
        %288 = vmatprep.subr.bf16.mxu0 0
        %289 = vmatpush1.bf16.xpose.msra.mxu0 0
        %290 = vmatprep.subr.bf16.mxu0 0
        %291 = vmatpush1.bf16.xpose.msra.mxu0 0
        %292 = vmatprep.subr.bf16.mxu0 0
        %293 = vmatpush1.bf16.xpose.msra.mxu0 0
        %294 = vmatprep.subr.bf16.mxu0 0
        %295 = vmatpush1.bf16.xpose.msra.mxu0 0
        %296 = vmatprep.subr.bf16.mxu0 0
        %297 = vmatpush1.bf16.xpose.msra.mxu0 0
        %298 = vmatprep.subr.bf16.mxu0 0
        %299 = vmatpush1.bf16.xpose.msra.mxu0 0
        %300 = vmatprep.subr.bf16.mxu0 0
        %301 = vmatpush1.bf16.xpose.msra.mxu0 0
        %302 = vmatprep.subr.bf16.mxu0 0
        %303 = vmatpush1.bf16.xpose.msra.mxu0 0
        %304 = vmatprep.subr.bf16.mxu0 0
        %305 = vmatpush1.bf16.xpose.msra.mxu0 0
        %306 = vmatprep.subr.bf16.mxu0 0
        %307 = vmatpush1.bf16.xpose.msra.mxu0 0
        %308 = vmatprep.subr.bf16.mxu0 0
        %309 = vmatpush1.bf16.xpose.msra.mxu0 0
        %310 = vmatprep.subr.bf16.mxu0 0
        %311 = vmatpush1.bf16.xpose.msra.mxu0 0
        %312 = vmatprep.subr.bf16.mxu0 0
        %313 = vmatpush1.bf16.xpose.msra.mxu0 0
        %314 = vmatprep.subr.bf16.mxu0 0
        %315 = vmatpush1.bf16.xpose.msra.mxu0 0
        %316 = vmatprep.subr.bf16.mxu0 0
        %317 = vmatpush1.bf16.xpose.msra.mxu0 0
        %318 = vmatprep.mubr.bf16.mxu0 0
        %319 = vmatmul.mubr.bf16.gmra.mrb[0].mxu0 %v281
        %v320 = vpop.f32.mrb[0].mxu0
        %v321 = vadd.f32 0.0, %v320
        %v322 = vpop.f32.mrb[0].mxu0
        %v323 = vpop.f32.mrb[0].mxu0
        %v324 = vpop.f32.mrb[0].mxu0
        %325 = vdwg.mxu0
        %vm326 = vcmask 64512
        %v327 = vsel %vm326, %v321, -inf
        %328 = vmax.xlane.f32.xlu0 %v327
        %v329 = vpop.xlane.xlu0 %328
        %v330 = vsub.f32 %v321, %v329
        %v331 = vmul.f32 %v330, 1.442695
        %v332 = vpow.pop %v331
        %v333 = vsel %vm326, %v332, 0.0
        %334 = vadd.xlane.f32.xlu0 %v333
        %v335 = vpop.xlane.xlu0 %334
        %v336 = vpack.c.bf16 %v332, %v332
        %337 = vrot.lane.b32.xlu0 %v275, 96
        %v338 = vpop.permute.xlu0 %337
        %v340 = vsel %vm326, %v336, 0
        %vm342 = vcmask 1043456
        %v344 = vsel %vm342, %v338, 0
        %346 = vmatprep.subr.bf16.mxu0 0
        %347 = vmatpush1.bf16.msra.mxu0 %v344
        %348 = vmatprep.subr.bf16.mxu0 0
        %349 = vmatpush1.bf16.msra.mxu0 0
        %350 = vmatprep.subr.bf16.mxu0 0
        %351 = vmatpush1.bf16.msra.mxu0 0
        %352 = vmatprep.subr.bf16.mxu0 0
        %353 = vmatpush1.bf16.msra.mxu0 0
        %354 = vmatprep.subr.bf16.mxu0 0
        %355 = vmatpush1.bf16.msra.mxu0 0
        %356 = vmatprep.subr.bf16.mxu0 0
        %357 = vmatpush1.bf16.msra.mxu0 0
        %358 = vmatprep.subr.bf16.mxu0 0
        %359 = vmatpush1.bf16.msra.mxu0 0
        %360 = vmatprep.subr.bf16.mxu0 0
        %361 = vmatpush1.bf16.msra.mxu0 0
        %362 = vmatprep.subr.bf16.mxu0 0
        %363 = vmatpush1.bf16.msra.mxu0 0
        %364 = vmatprep.subr.bf16.mxu0 0
        %365 = vmatpush1.bf16.msra.mxu0 0
        %366 = vmatprep.subr.bf16.mxu0 0
        %367 = vmatpush1.bf16.msra.mxu0 0
        %368 = vmatprep.subr.bf16.mxu0 0
        %369 = vmatpush1.bf16.msra.mxu0 0
        %370 = vmatprep.subr.bf16.mxu0 0
        %371 = vmatpush1.bf16.msra.mxu0 0
        %372 = vmatprep.subr.bf16.mxu0 0
        %373 = vmatpush1.bf16.msra.mxu0 0
        %374 = vmatprep.subr.bf16.mxu0 0
        %375 = vmatpush1.bf16.msra.mxu0 0
        %376 = vmatprep.subr.bf16.mxu0 0
        %377 = vmatpush1.bf16.msra.mxu0 0
        %378 = vmatprep.mubr.bf16.mxu0 0
        %379 = vmatmul.mubr.bf16.gmra.mrb[0].mxu0 %v340
        %v380 = vpop.f32.mrb[0].mxu0
        %v381 = vadd.f32 0.0, %v380
        %v382 = vpop.f32.mrb[0].mxu0
        %v383 = vpop.f32.mrb[0].mxu0
        %v384 = vpop.f32.mrb[0].mxu0
        %385 = vdwg.mxu0
        %v386 = vrcp.pop %v335
        %v387 = vmul.f32 %v381, %v386
        %v388 = vpack.c.bf16 %v387, %v387
        %vm389 = vcmask 125952
        %390 = vst.msk [vmem:[%s212] sm:$0xf] %vm389, %v388
        %s391 = sand.u32 %s96, 1
        %s392 = scalar_lea.sflag [#allocation4], %s391
        %s393 = sand.u32 %s96, 1
        %s394 = smul.addr %s393, 4
        %s395 = scalar_lea.vmem [#allocation7], %s394
        // Predicated region
        $region37: #{tpu_custom_call.1} parent=27 // pred_check
          %p396 = pneg %p106
        $region38: #{tpu_custom_call.1} parent=27 // pred_check_branch
          %398 = sbr.rel (%p396) target = $region40
        $region39: #{tpu_custom_call.1} parent=27 // pred_region
          %s400 = ssub.s32 64, 64
          %401 = vsyncadd %s392, %s400
          %s402 = smul.addr %s27, 2
          %s403 = sadd.s32 %s26, %s402
          %s404 = smul.addr %s403, 64
          %s405 = scalar_lea.hbm %s2, %s404
          %s407 = sshll.u32 %s395, 4
          %s408 = int_to_ptr.vmem [resolvable:$true] %s407
          %410 = dma.vmem_to_hbm [thread:$0]  %s408, 64, %s405, %s392
        $region40: #{tpu_custom_call.1} parent=27 // pred_fallthru
          _
      $region28: #{tpu_custom_call.1} parent=5 // pred_fallthru
        _
      %p411 = scmp.le.s32.totalorder 2, %s17
      // Predicated region
      $region41: #{tpu_custom_call.1} parent=5 // pred_check
        %p412 = pneg %p411
      $region42: #{tpu_custom_call.1} parent=5 // pred_check_branch
        %414 = sbr.rel (%p412) target = $region44
      $region43: #{tpu_custom_call.1} parent=5 // pred_region
        %s415 = ssub.s32 %s17, 2
        // Predicated region
        $region45: #{tpu_custom_call.1} parent=43 // pred_check
          %p416 = pneg %p112
        $region46: #{tpu_custom_call.1} parent=43 // pred_check_branch
          %418 = sbr.rel (%p416) target = $region48
        $region47: #{tpu_custom_call.1} parent=43 // pred_region
          %s419 = sand.u32 %s97, 1
          %s420 = scalar_lea.sflag [#allocation4], %s419
          %s421 = sand.u32 %s97, 1
          %s422 = smul.addr %s421, 4
          %s423 = scalar_lea.vmem [#allocation7], %s422
          %424 = dma.done %s420, 64
        $region48: #{tpu_custom_call.1} parent=43 // pred_fallthru
          _
      $region44: #{tpu_custom_call.1} parent=5 // pred_fallthru
        _
    $region6: #{tpu_custom_call.1} parent=1 // loop_footer
      %s21 = sadd.s32 1, %s17
    $region7: #{tpu_custom_call.1} parent=1 // loop_footer_branch
      %16 = sbr.rel target = $region3
    $region8: #{tpu_custom_call.1} parent=1 // loop_exit
      _
    %425 = vsyncpa [#allocation3], 1
    %s426 = scalar_lea.sflag [#allocation3], 1
    %427 = vsyncpa %s426, 1
    %428 = vsyncpa [#allocation6], 1
    %s429 = scalar_lea.sflag [#allocation6], 1
    %430 = vsyncpa %s429, 1
    %431 = vsyncpa [#allocation4], 1
    %s432 = scalar_lea.sflag [#allocation4], 1
    %433 = vsyncpa %s432, 1

</llo_original>
